<compile_context>
chip_gen: v5e
topology: v5e:2x2
jax: 0.10.0
libtpu: 0.0.40
codegen_flags: <defaults>
</compile_context>

<pallas_src>
import jax
import jax.numpy as jnp
from jax.experimental import pallas as pl
from jax.experimental.pallas import tpu as pltpu


def _round_up(x, m):
    return (x + m - 1) // m * m


def _linear_sigmoid_kernel(x_ref, w_ref, b_ref, o_ref, acc_ref):
    """One (batch-tile, n-tile, k-tile) grid step of sigmoid(x @ w + b).

    Grid = (batch, N, K). K is the innermost reduction ("arbitrary") axis, so
    partial products accumulate in f32 VMEM scratch and the bias + sigmoid
    epilogue runs exactly once per output tile.
    """
    k = pl.program_id(2)

    @pl.when(k == 0)
    def _init():
        acc_ref[...] = jnp.zeros_like(acc_ref)

    acc_ref[...] += jnp.dot(x_ref[...], w_ref[...],
                            preferred_element_type=jnp.float32)

    @pl.when(k == pl.num_programs(2) - 1)
    def _finalize():
        z = acc_ref[...] + b_ref[...]               # (tb, tn) + (1, tn)
        o_ref[...] = jax.nn.sigmoid(z).astype(o_ref.dtype)


def neural_net_forward(x, w, b, *, block_b=512, block_n=512, block_k=2048,
                       mxu_dtype=None, vmem_budget_bytes=48 << 20):
    """Forward of NeuralNet: sigmoid(x @ w + b).

    x: (B, input_size) activations
    w: (input_size, num_classes)  -- PyTorch weight pre-transposed
    b: (num_classes,)
    block_b/block_n/block_k: target tile sizes for batch / out-features / K.
    mxu_dtype: None = auto (bf16 MXU inputs for non-tiny GEMMs, else keep f32).
    vmem_budget_bytes: per-step working-set budget (conservative for v7x 64MiB).
    """
    B, in_f = x.shape
    in_w, out_f = w.shape
    assert in_w == in_f, "weight must be (input_size, num_classes)"
    assert b.shape == (out_f,)

    out_dtype = x.dtype

    # --- MXU input dtype -----------------------------------------------------
    # bf16 x/w (f32 accumulate, f32 epilogue) for non-tiny GEMMs: 2-4x MXU
    # throughput on v5e/v6e and half the x/w HBM bytes. Tiny shapes stay f32.
    if mxu_dtype is None:
        mxu_dtype = jnp.bfloat16 if (in_f >= 256 and out_f >= 256) else x.dtype
    mxu_dtype = jnp.dtype(mxu_dtype)
    x_in = x if x.dtype == mxu_dtype else x.astype(mxu_dtype)
    w_in = w if w.dtype == mxu_dtype else w.astype(mxu_dtype)
    bias2d = b.astype(jnp.float32).reshape(1, out_f)

    x_it = mxu_dtype.itemsize
    o_it = jnp.dtype(out_dtype).itemsize

    # --- K (reduction) tiling: only when large AND an exact 128-multiple
    # divisor exists, so x/w never need a padded copy and no out-of-bounds
    # garbage can reach the accumulator.
    tk, grid_k = in_f, 1
    if in_f > block_k and in_f % 128 == 0:
        for cand in range(block_k, 127, -128):
            if in_f % cand == 0:
                tk, grid_k = cand, in_f // cand
                break
    # TODO(synk): a huge, non-128-aligned input_size would need a one-time
    # zero-padded copy of x/w before K-splitting; not needed for these shapes.

    # --- N (out-features) tiling: keep the resident weight slab within budget,
    # and guarantee >=2 parallel grid steps for v7x's two TensorCores when the
    # batch grid is short. Only when out_f is 128-aligned (no pad copy).
    w_slab_cap = 16 << 20
    tn, grid_n = out_f, 1
    if out_f % 128 == 0 and out_f > 128:
        short_batch_grid = B <= block_b            # batch axis would have 1 step
        if tk * out_f * x_it > w_slab_cap or (short_batch_grid and out_f >= 256):
            target = min(block_n, max(128, (out_f // 2) // 128 * 128))
            n_tiles = pl.cdiv(out_f, target)
            tn = _round_up(pl.cdiv(out_f, n_tiles), 128)
            grid_n = pl.cdiv(out_f, tn)

    # --- batch tiling: no pre-padded copy of x. A ragged last tile is handled
    # by Pallas boundary masking (out-of-bounds rows are never written back).
    if B <= block_b:
        tb, grid_b = B, 1
    else:
        n_tiles = pl.cdiv(B, block_b)
        tb = _round_up(pl.cdiv(B, n_tiles), 8)
        grid_b = pl.cdiv(B, tb)

    # Fit the per-step working set into the scoped-VMEM budget: resident
    # weight/bias + double-buffered x/out tiles + f32 accumulator scratch.
    consts_static = (grid_n == 1 and grid_k == 1)
    w_bufs = 1 if consts_static else 2
    b_bufs = 1 if grid_n == 1 else 2
    fixed = w_bufs * tk * tn * x_it + b_bufs * 8 * tn * 4
    per_row = 2 * tk * x_it + 2 * tn * o_it + tn * 4
    tb_cap = max(8, (vmem_budget_bytes - fixed) // max(per_row, 1) // 8 * 8)
    if tb > tb_cap:
        tb = tb_cap
        grid_b = pl.cdiv(B, tb)

    # Scoped-VMEM limit: never below the 32 MiB default, raised with headroom
    # (pessimistically assuming double-buffered weight/bias) when needed.
    est_vmem = 2 * tk * tn * x_it + 2 * 8 * tn * 4 + tb * per_row
    vmem_limit = int(min(max(32 << 20, est_vmem * 5 // 4 + (2 << 20)), 100 << 20))

    grid = (grid_b, grid_n, grid_k)
    flops = 2 * B * in_f * out_f
    bytes_accessed = (B * in_f * x_it + in_f * out_f * x_it
                      + out_f * 4 + B * out_f * o_it)

    def build(single_buffer_consts):
        w_mode = pl.Buffered(1) if (single_buffer_consts and consts_static) else None
        b_mode = pl.Buffered(1) if (single_buffer_consts and grid_n == 1) else None
        return pl.pallas_call(
            _linear_sigmoid_kernel,
            out_shape=jax.ShapeDtypeStruct((B, out_f), out_dtype),
            grid=grid,
            in_specs=[
                # x: streamed batch/K tiles.
                pl.BlockSpec((tb, tk), lambda i, j, k: (i, k)),
                # weight: VMEM-resident (single-buffered) when index is constant.
                pl.BlockSpec((tk, tn), lambda i, j, k: (k, j),
                             pipeline_mode=w_mode),
                # bias row.
                pl.BlockSpec((1, tn), lambda i, j, k: (0, j),
                             pipeline_mode=b_mode),
            ],
            out_specs=pl.BlockSpec((tb, tn), lambda i, j, k: (i, j)),
            scratch_shapes=[pltpu.VMEM((tb, tn), jnp.float32)],
            compiler_params=pltpu.CompilerParams(
                dimension_semantics=("parallel", "parallel", "arbitrary"),
                vmem_limit_bytes=vmem_limit),
            cost_estimate=pl.CostEstimate(
                flops=flops, transcendentals=B * out_f,
                bytes_accessed=bytes_accessed),
        )

    try:
        return build(True)(x_in, w_in, bias2d)
    except Exception:
        # Fallback for stacks without top-level single-buffer (Buffered(1))
        # support on constant-index operands: default double-buffering.
        return build(False)(x_in, w_in, bias2d)


if __name__ == "__main__":
    # Small shapes consistent with the module's forward.
    batch = 8
    input_size = 32
    num_classes = 16

    key = jax.random.PRNGKey(0)
    kx, kw, kb = jax.random.split(key, 3)

    # Deterministic init mirroring nn.Linear default: U(-1/sqrt(in), 1/sqrt(in)).
    bound = 1.0 / jnp.sqrt(jnp.float32(input_size))
    x = jax.random.normal(kx, (batch, input_size), dtype=jnp.float32)
    # PyTorch stores weight as (num_classes, input_size); pre-transpose for kernel.
    w_torch_layout = jax.random.uniform(
        kw, (num_classes, input_size), minval=-bound, maxval=bound,
        dtype=jnp.float32)
    b = jax.random.uniform(
        kb, (num_classes,), minval=-bound, maxval=bound, dtype=jnp.float32)
    w = w_torch_layout.T  # (input_size, num_classes)

    out = neural_net_forward(x, w, b)
    jax.block_until_ready(out)

    ref = jax.nn.sigmoid(x @ w + b[None, :])
    assert out.shape == (batch, num_classes)
    assert jnp.allclose(out, ref, atol=1e-5, rtol=1e-5)

    # Also exercise the multi-tile batch path: ragged last tile handled by
    # Pallas boundary masking (no pre-padded copy of x, no output slice).
    k2x, k2w, k2b = jax.random.split(jax.random.PRNGKey(0), 3)
    B2, IN2, OUT2 = 300, 128, 64
    x2 = jax.random.normal(k2x, (B2, IN2), dtype=jnp.float32)
    w2 = jax.random.normal(k2w, (IN2, OUT2), dtype=jnp.float32) * 0.05
    b2 = jax.random.normal(k2b, (OUT2,), dtype=jnp.float32) * 0.05
    out2 = neural_net_forward(x2, w2, b2, block_b=128)
    jax.block_until_ready(out2)
    ref2 = jax.nn.sigmoid(
        jnp.dot(x2, w2, precision=jax.lax.Precision.HIGHEST) + b2[None, :])
    assert out2.shape == (B2, OUT2)
    assert jnp.allclose(out2, ref2, atol=1e-4, rtol=1e-4)

    print("KERNEL_OK")
</pallas_src>

<mosaic_0001>
module attributes {stable_mosaic.version = 11 : i64} {
  func.func @_linear_sigmoid_kernel(%arg0: i32, %arg1: i32, %arg2: i32, %arg3: memref<8x32xf32, #tpu.memory_space<vmem>>, %arg4: memref<32x16xf32, #tpu.memory_space<vmem>>, %arg5: memref<1x16xf32, #tpu.memory_space<vmem>>, %arg6: memref<8x16xf32, #tpu.memory_space<vmem>>, %arg7: memref<8x16xf32, #tpu.memory_space<vmem>>) attributes {dimension_semantics = [#tpu.dimension_semantics<parallel>, #tpu.dimension_semantics<parallel>, #tpu.dimension_semantics<arbitrary>], iteration_bounds = array<i64: 1, 1, 1>, scalar_prefetch = 0 : i64, scratch_operands = 1 : i64, tpu.core_type = #tpu.core_type<tc>, window_params = [{transform_indices = @transform_0, window_bounds = array<i64: 8, 32>}, {pipeline_mode = #tpu.pipeline_mode<synchronous>, transform_indices = @transform_1, window_bounds = array<i64: 32, 16>}, {pipeline_mode = #tpu.pipeline_mode<synchronous>, transform_indices = @transform_2, window_bounds = array<i64: 1, 16>}, {transform_indices = @transform_3, window_bounds = array<i64: 8, 16>}]} {
    %c0_i32 = arith.constant 0 : i32
    %0 = arith.cmpi eq, %arg2, %c0_i32 : i32
    %1 = arith.extui %0 : i1 to i32
    %c0_i32_0 = arith.constant 0 : i32
    %2 = arith.cmpi ne, %1, %c0_i32_0 : i32
    scf.if %2 {
      %cst_10 = arith.constant 0.000000e+00 : f32
      %12 = vector.broadcast %cst_10 : f32 to vector<8x16xf32>
      %c0_11 = arith.constant 0 : index
      %c0_12 = arith.constant 0 : index
      %13 = vector.load %arg7[%c0_11, %c0_12] : memref<8x16xf32, #tpu.memory_space<vmem>>, vector<8x16xf32>
      tpu.vector_store %arg7[%c0_11, %c0_12], %12 {strides = array<i32>} : memref<8x16xf32, #tpu.memory_space<vmem>>, vector<8x16xf32>,
    } else {
    }
    %c0 = arith.constant 0 : index
    %c0_1 = arith.constant 0 : index
    %3 = vector.load %arg7[%c0, %c0_1] : memref<8x16xf32, #tpu.memory_space<vmem>>, vector<8x16xf32>
    %c0_2 = arith.constant 0 : index
    %c0_3 = arith.constant 0 : index
    %4 = vector.load %arg3[%c0_2, %c0_3] : memref<8x32xf32, #tpu.memory_space<vmem>>, vector<8x32xf32>
    %c0_4 = arith.constant 0 : index
    %c0_5 = arith.constant 0 : index
    %5 = vector.load %arg4[%c0_4, %c0_5] : memref<32x16xf32, #tpu.memory_space<vmem>>, vector<32x16xf32>
    %cst = arith.constant dense<0.000000e+00> : vector<8x16xf32>
    %6 = tpu.matmul %4, %5, %cst {dimension_numbers = #tpu.dot_dimension_numbers<[1], [0], [0], [1], [0, 0, 1, 1], [], []>} : vector<8x32xf32>, vector<32x16xf32>, vector<8x16xf32> -> vector<8x16xf32>
    %7 = arith.addf %3, %6 : vector<8x16xf32>
    %c0_6 = arith.constant 0 : index
    %c0_7 = arith.constant 0 : index
    %8 = vector.load %arg7[%c0_6, %c0_7] : memref<8x16xf32, #tpu.memory_space<vmem>>, vector<8x16xf32>
    tpu.vector_store %arg7[%c0_6, %c0_7], %7 {strides = array<i32>} : memref<8x16xf32, #tpu.memory_space<vmem>>, vector<8x16xf32>,
    %c0_i32_8 = arith.constant 0 : i32
    %9 = arith.cmpi eq, %arg2, %c0_i32_8 : i32
    %10 = arith.extui %9 : i1 to i32
    %c0_i32_9 = arith.constant 0 : i32
    %11 = arith.cmpi ne, %10, %c0_i32_9 : i32
    scf.if %11 {
      %c0_10 = arith.constant 0 : index
      %c0_11 = arith.constant 0 : index
      %12 = vector.load %arg7[%c0_10, %c0_11] : memref<8x16xf32, #tpu.memory_space<vmem>>, vector<8x16xf32>
      %c0_12 = arith.constant 0 : index
      %c0_13 = arith.constant 0 : index
      %13 = vector.load %arg5[%c0_12, %c0_13] : memref<1x16xf32, #tpu.memory_space<vmem>>, vector<1x16xf32>
      %14 = vector.broadcast %13 : vector<1x16xf32> to vector<8x16xf32>
      %15 = arith.addf %12, %14 : vector<8x16xf32>
      %16 = arith.negf %15 : vector<8x16xf32>
      %17 = math.exp %16 : vector<8x16xf32>
      %cst_14 = arith.constant 1.000000e+00 : f32
      %18 = vector.broadcast %cst_14 : f32 to vector<8x16xf32>
      %19 = arith.addf %18, %17 : vector<8x16xf32>
      %20 = arith.divf %18, %19 : vector<8x16xf32>
      %c0_15 = arith.constant 0 : index
      %c0_16 = arith.constant 0 : index
      %21 = vector.load %arg6[%c0_15, %c0_16] : memref<8x16xf32, #tpu.memory_space<vmem>>, vector<8x16xf32>
      tpu.vector_store %arg6[%c0_15, %c0_16], %20 {strides = array<i32>} : memref<8x16xf32, #tpu.memory_space<vmem>>, vector<8x16xf32>,
    } else {
    }
    return
  }
  func.func @transform_0(%arg0: i32, %arg1: i32, %arg2: i32) -> (i32, i32) {
    %c0_i32 = arith.constant 0 : i32
    return %arg0, %arg2 : i32, i32
  }
  func.func @transform_1(%arg0: i32, %arg1: i32, %arg2: i32) -> (i32, i32) {
    %c0_i32 = arith.constant 0 : i32
    return %arg2, %arg1 : i32, i32
  }
  func.func @transform_2(%arg0: i32, %arg1: i32, %arg2: i32) -> (i32, i32) {
    %c0_i32 = arith.constant 0 : i32
    %c0_i32_0 = arith.constant 0 : i32
    return %c0_i32, %arg1 : i32, i32
  }
  func.func @transform_3(%arg0: i32, %arg1: i32, %arg2: i32) -> (i32, i32) {
    %c0_i32 = arith.constant 0 : i32
    return %arg0, %arg1 : i32, i32
  }
}

module attributes {stable_mosaic.version = 11 : i64} {
  func.func @_linear_sigmoid_kernel(%arg0: i32, %arg1: i32, %arg2: i32, %arg3: memref<8x32xf32, #tpu.memory_space<vmem>>, %arg4: memref<32x16xf32, #tpu.memory_space<vmem>>, %arg5: memref<1x16xf32, #tpu.memory_space<vmem>>, %arg6: memref<8x16xf32, #tpu.memory_space<vmem>>, %arg7: memref<8x16xf32, #tpu.memory_space<vmem>>) attributes {dimension_semantics = [#tpu.dimension_semantics<parallel>, #tpu.dimension_semantics<parallel>, #tpu.dimension_semantics<arbitrary>], iteration_bounds = array<i64: 1, 1, 1>, scalar_prefetch = 0 : i64, scratch_operands = 1 : i64, tpu.core_type = #tpu.core_type<tc>, window_params = [{transform_indices = @transform_0, window_bounds = array<i64: 8, 32>}, {transform_indices = @transform_1, window_bounds = array<i64: 32, 16>}, {transform_indices = @transform_2, window_bounds = array<i64: 1, 16>}, {transform_indices = @transform_3, window_bounds = array<i64: 8, 16>}]} {
    %c0_i32 = arith.constant 0 : i32
    %0 = arith.cmpi eq, %arg2, %c0_i32 : i32
    %1 = arith.extui %0 : i1 to i32
    %c0_i32_0 = arith.constant 0 : i32
    %2 = arith.cmpi ne, %1, %c0_i32_0 : i32
    scf.if %2 {
      %cst_10 = arith.constant 0.000000e+00 : f32
      %12 = vector.broadcast %cst_10 : f32 to vector<8x16xf32>
      %c0_11 = arith.constant 0 : index
      %c0_12 = arith.constant 0 : index
      %13 = vector.load %arg7[%c0_11, %c0_12] : memref<8x16xf32, #tpu.memory_space<vmem>>, vector<8x16xf32>
      tpu.vector_store %arg7[%c0_11, %c0_12], %12 {strides = array<i32>} : memref<8x16xf32, #tpu.memory_space<vmem>>, vector<8x16xf32>,
    } else {
    }
    %c0 = arith.constant 0 : index
    %c0_1 = arith.constant 0 : index
    %3 = vector.load %arg7[%c0, %c0_1] : memref<8x16xf32, #tpu.memory_space<vmem>>, vector<8x16xf32>
    %c0_2 = arith.constant 0 : index
    %c0_3 = arith.constant 0 : index
    %4 = vector.load %arg3[%c0_2, %c0_3] : memref<8x32xf32, #tpu.memory_space<vmem>>, vector<8x32xf32>
    %c0_4 = arith.constant 0 : index
    %c0_5 = arith.constant 0 : index
    %5 = vector.load %arg4[%c0_4, %c0_5] : memref<32x16xf32, #tpu.memory_space<vmem>>, vector<32x16xf32>
    %cst = arith.constant dense<0.000000e+00> : vector<8x16xf32>
    %6 = tpu.matmul %4, %5, %cst {dimension_numbers = #tpu.dot_dimension_numbers<[1], [0], [0], [1], [0, 0, 1, 1], [], []>} : vector<8x32xf32>, vector<32x16xf32>, vector<8x16xf32> -> vector<8x16xf32>
    %7 = arith.addf %3, %6 : vector<8x16xf32>
    %c0_6 = arith.constant 0 : index
    %c0_7 = arith.constant 0 : index
    %8 = vector.load %arg7[%c0_6, %c0_7] : memref<8x16xf32, #tpu.memory_space<vmem>>, vector<8x16xf32>
    tpu.vector_store %arg7[%c0_6, %c0_7], %7 {strides = array<i32>} : memref<8x16xf32, #tpu.memory_space<vmem>>, vector<8x16xf32>,
    %c0_i32_8 = arith.constant 0 : i32
    %9 = arith.cmpi eq, %arg2, %c0_i32_8 : i32
    %10 = arith.extui %9 : i1 to i32
    %c0_i32_9 = arith.constant 0 : i32
    %11 = arith.cmpi ne, %10, %c0_i32_9 : i32
    scf.if %11 {
      %c0_10 = arith.constant 0 : index
      %c0_11 = arith.constant 0 : index
      %12 = vector.load %arg7[%c0_10, %c0_11] : memref<8x16xf32, #tpu.memory_space<vmem>>, vector<8x16xf32>
      %c0_12 = arith.constant 0 : index
      %c0_13 = arith.constant 0 : index
      %13 = vector.load %arg5[%c0_12, %c0_13] : memref<1x16xf32, #tpu.memory_space<vmem>>, vector<1x16xf32>
      %14 = vector.broadcast %13 : vector<1x16xf32> to vector<8x16xf32>
      %15 = arith.addf %12, %14 : vector<8x16xf32>
      %16 = arith.negf %15 : vector<8x16xf32>
      %17 = math.exp %16 : vector<8x16xf32>
      %cst_14 = arith.constant 1.000000e+00 : f32
      %18 = vector.broadcast %cst_14 : f32 to vector<8x16xf32>
      %19 = arith.addf %18, %17 : vector<8x16xf32>
      %20 = arith.divf %18, %19 : vector<8x16xf32>
      %c0_15 = arith.constant 0 : index
      %c0_16 = arith.constant 0 : index
      %21 = vector.load %arg6[%c0_15, %c0_16] : memref<8x16xf32, #tpu.memory_space<vmem>>, vector<8x16xf32>
      tpu.vector_store %arg6[%c0_15, %c0_16], %20 {strides = array<i32>} : memref<8x16xf32, #tpu.memory_space<vmem>>, vector<8x16xf32>,
    } else {
    }
    return
  }
  func.func @transform_0(%arg0: i32, %arg1: i32, %arg2: i32) -> (i32, i32) {
    %c0_i32 = arith.constant 0 : i32
    return %arg0, %arg2 : i32, i32
  }
  func.func @transform_1(%arg0: i32, %arg1: i32, %arg2: i32) -> (i32, i32) {
    %c0_i32 = arith.constant 0 : i32
    return %arg2, %arg1 : i32, i32
  }
  func.func @transform_2(%arg0: i32, %arg1: i32, %arg2: i32) -> (i32, i32) {
    %c0_i32 = arith.constant 0 : i32
    %c0_i32_0 = arith.constant 0 : i32
    return %c0_i32, %arg1 : i32, i32
  }
  func.func @transform_3(%arg0: i32, %arg1: i32, %arg2: i32) -> (i32, i32) {
    %c0_i32 = arith.constant 0 : i32
    return %arg0, %arg1 : i32, i32
  }
}

</mosaic_0001>

<llo_original>
// kernel: tpu_custom_call.1
$region0: #{tpu_custom_call.1}
  #allocation0 [shape = 'u32[]', space=smem, size = 0x4, offset = 0x4, fixed_abs, tag = 'smem constant byte address 0x4 - core index']
  #allocation1 [shape = 'u32[72,128]{1,0:T(1,128)}', space=vmem, size = 0x9000, scoped, tag = 'internal scratch']
  #allocation2 [shape = 'f32[8,16]{1,0:T(8,128)}', space=vmem, size = 0x1000, scoped, tag = 'scratch operand']
  %s0 = inlined_call_operand.vmem [shape: f32[8,32], index: 0, kind: input, shape index: {}]
  %s1 = inlined_call_operand.vmem [shape: f32[32,16], index: 1, kind: input, shape index: {}]
  %s2 = inlined_call_operand.vmem [shape: f32[1,16], index: 2, kind: input, shape index: {}]
  %s3 = inlined_call_operand.hbm [shape: f32[8,16], index: 3, kind: output, shape index: {}]
  %s4 = sld [smem:[#allocation0]]
  $region30: #{tpu_custom_call.1} parent=0
    _
  %s6 = ssub.s32 1, %s4
  %s7 = scalar_select 0, %s6, %s4
  $region1: #{tpu_custom_call.1} parent=0
    #allocation3 [shape = 'u8[4096]{0}', space=vmem, size = 0x1000, scoped, tag = 'output window, operand 0, single buffered']
    #allocation4 [shape = 's32[1]{0}', space=sflag, size = 0x4, scoped, tag = 'scoped memory for tpu_custom_call.1']
    %8 = vsyncpa [#allocation4], 0
    // Predicated region
    $region2: #{tpu_custom_call.1} parent=1 // pred_check
      _
    $region3: #{tpu_custom_call.1} parent=1 // pred_check_branch
      %10 = sbr.rel (0) target = $region5
    $region4: #{tpu_custom_call.1} parent=1 // pred_region
      _
    $region5: #{tpu_custom_call.1} parent=1 // pred_fallthru
      _
    // Predicated region
    $region6: #{tpu_custom_call.1} parent=1 // pred_check
      _
    $region7: #{tpu_custom_call.1} parent=1 // pred_check_branch
      %12 = sbr.rel (0) target = $region9
    $region8: #{tpu_custom_call.1} parent=1 // pred_region
      _
    $region9: #{tpu_custom_call.1} parent=1 // pred_fallthru
      _
    // Predicated region
    $region10: #{tpu_custom_call.1} parent=1 // pred_check
      _
    $region11: #{tpu_custom_call.1} parent=1 // pred_check_branch
      %14 = sbr.rel (0) target = $region13
    $region12: #{tpu_custom_call.1} parent=1 // pred_region
      _
    $region13: #{tpu_custom_call.1} parent=1 // pred_fallthru
      _
    %p15 = scmp.eq.s32.totalorder 0, 0
    // Predicated region
    $region14: #{tpu_custom_call.1} parent=1 // pred_check
      %p16 = pneg %p15
    $region15: #{tpu_custom_call.1} parent=1 // pred_check_branch
      %18 = sbr.rel (%p16) target = $region17
    $region16: #{tpu_custom_call.1} parent=1 // pred_region
      %vm19 = vcmask 130048
      %20 = vst.msk [vmem:[#allocation2] sm:$0xff] %vm19, 0.0
    $region17: #{tpu_custom_call.1} parent=1 // pred_fallthru
      _
    %v21 = vld [vmem:[#allocation2] sm:$0xff]
    %v22 = vld [vmem:[%s0] sm:$0xff]
    %v23 = vld [vmem:[%s1] sm:$0xff]
    %v24 = vld [vmem:[%s1 + $0x8] sm:$0xff]
    %v25 = vld [vmem:[%s1 + $0x10] sm:$0xff]
    %v26 = vld [vmem:[%s1 + $0x18] sm:$0xff]
    %vm27 = vcmask 261120
    %v29 = vsel %vm27, %v22, 0
    %31 = vmatpush.msra.mxu0 0.0
    %32 = vmatpush.msra.mxu0 0.0
    %33 = vmatpush.msra.mxu0 0.0
    %34 = vmatpush.msra.mxu0 0.0
    %35 = vmatpush.msra.mxu0 0.0
    %36 = vmatpush.msra.mxu0 0.0
    %37 = vmatpush.msra.mxu0 0.0
    %38 = vmatpush.msra.mxu0 0.0
    %39 = vmatpush.msra.mxu0 0.0
    %40 = vmatpush.msra.mxu0 0.0
    %41 = vmatpush.msra.mxu0 0.0
    %42 = vmatpush.msra.mxu0 0.0
    %43 = vmatpush.msra.mxu0 %v26
    %44 = vmatpush.msra.mxu0 %v25
    %45 = vmatpush.msra.mxu0 %v24
    %46 = vmatpush.msra.mxu0 %v23
    %47 = vmatmul.f32.gmra.mxu0 %v29
    %v48 = vpop.f32.mrf.mxu0
    %v49 = vadd.f32 0.0, %v48
    %50 = vdwg.mxu0
    %v51 = vadd.f32 %v21, %v49
    %vm52 = vcmask 130048
    %53 = vst.msk [vmem:[#allocation2] sm:$0xff] %vm52, %v51
    // Predicated region
    $region18: #{tpu_custom_call.1} parent=1 // pred_check
      %p54 = pneg %p15
    $region19: #{tpu_custom_call.1} parent=1 // pred_check_branch
      %56 = sbr.rel (%p54) target = $region21
    $region20: #{tpu_custom_call.1} parent=1 // pred_region
      %v57 = vld [vmem:[#allocation2] sm:$0xff]
      %v58 = vld [vmem:[%s2] sm:$0x1]
      %v60 = vperm.slane %v58, 0
      %v62 = vadd.f32 %v57, %v60
      %v63 = vxor.u32 %v62, 2147483648
      %v64 = vmul.f32 %v63, 1.442695
      %v65 = vpow.pop %v64
      %v66 = vadd.f32 %v65, 1.0
      %v67 = vrcp.pop %v66
      %v68 = vmul.f32 %v66, %v67
      %v69 = vsub.f32 1.0, %v68
      %v70 = vmul.f32 %v67, %v69
      %v71 = vadd.f32 %v67, %v70
      %vm72 = vweird.f32 %v66
      %vm73 = vweird.f32 %v67
      %vm74 = vmor %vm72, %vm73
      %v75 = vsel %vm74, %v67, %v71
      %v76 = vand.u32 2147483647, %v66
      %vm77 = vcmp.eq.f32.partialorder %v76, 8.507059e+37
      %v78 = vand.u32 %v66, 2147483648
      %v79 = vor.u32 1.1754944e-38, %v78
      %v80 = vsel %vm77, %v79, %v75
      %v81 = vmul.f32 1.0, %v80
      %82 = vst.msk [vmem:[#allocation3] sm:$0xff] %vm52, %v81
    $region21: #{tpu_custom_call.1} parent=1 // pred_fallthru
      _
    // Predicated region
    $region22: #{tpu_custom_call.1} parent=1 // pred_check
      _
    $region23: #{tpu_custom_call.1} parent=1 // pred_check_branch
      %84 = sbr.rel (0) target = $region25
    $region24: #{tpu_custom_call.1} parent=1 // pred_region
      %86 = vsyncadd [#allocation4], 0
      %s88 = sshll.u32 [#allocation3], 4
      %s89 = int_to_ptr.vmem [resolvable:$true] %s88
      %s90 = sshll.u32 %s3, 4
      %s91 = int_to_ptr.hbm [resolvable:$true] %s90
      %93 = dma.vmem_to_hbm [thread:$0]  %s89, 128, %s91, [#allocation4]
    $region25: #{tpu_custom_call.1} parent=1 // pred_fallthru
      _
    // Predicated region
    $region26: #{tpu_custom_call.1} parent=1 // pred_check
      _
    $region27: #{tpu_custom_call.1} parent=1 // pred_check_branch
      %95 = sbr.rel (0) target = $region29
    $region28: #{tpu_custom_call.1} parent=1 // pred_region
      %97 = dma.done [#allocation4], 128
    $region29: #{tpu_custom_call.1} parent=1 // pred_fallthru
      _
    %98 = vsyncpa [#allocation4], 1

// kernel: tpu_custom_call.1
$region0: #{tpu_custom_call.1}
  #allocation0 [shape = 'u32[]', space=smem, size = 0x4, offset = 0x4, fixed_abs, tag = 'smem constant byte address 0x4 - core index']
  #allocation1 [shape = 'u32[72,128]{1,0:T(1,128)}', space=vmem, size = 0x9000, scoped, tag = 'internal scratch']
  #allocation2 [shape = 'f32[8,16]{1,0:T(8,128)}', space=vmem, size = 0x1000, scoped, tag = 'scratch operand']
  %s0 = inlined_call_operand.vmem [shape: f32[8,32], index: 0, kind: input, shape index: {}]
  %s1 = inlined_call_operand.vmem [shape: f32[32,16], index: 1, kind: input, shape index: {}]
  %s2 = inlined_call_operand.vmem [shape: f32[1,16], index: 2, kind: input, shape index: {}]
  %s3 = inlined_call_operand.hbm [shape: f32[8,16], index: 3, kind: output, shape index: {}]
  %s4 = sld [smem:[#allocation0]]
  $region30: #{tpu_custom_call.1} parent=0
    _
  %s6 = ssub.s32 1, %s4
  %s7 = scalar_select 0, %s6, %s4
  $region1: #{tpu_custom_call.1} parent=0
    #allocation3 [shape = 'u8[4096]{0}', space=vmem, size = 0x1000, scoped, tag = 'output window, operand 0, single buffered']
    #allocation4 [shape = 's32[1]{0}', space=sflag, size = 0x4, scoped, tag = 'scoped memory for tpu_custom_call.1']
    %8 = vsyncpa [#allocation4], 0
    // Predicated region
    $region2: #{tpu_custom_call.1} parent=1 // pred_check
      _
    $region3: #{tpu_custom_call.1} parent=1 // pred_check_branch
      %10 = sbr.rel (0) target = $region5
    $region4: #{tpu_custom_call.1} parent=1 // pred_region
      _
    $region5: #{tpu_custom_call.1} parent=1 // pred_fallthru
      _
    // Predicated region
    $region6: #{tpu_custom_call.1} parent=1 // pred_check
      _
    $region7: #{tpu_custom_call.1} parent=1 // pred_check_branch
      %12 = sbr.rel (0) target = $region9
    $region8: #{tpu_custom_call.1} parent=1 // pred_region
      _
    $region9: #{tpu_custom_call.1} parent=1 // pred_fallthru
      _
    // Predicated region
    $region10: #{tpu_custom_call.1} parent=1 // pred_check
      _
    $region11: #{tpu_custom_call.1} parent=1 // pred_check_branch
      %14 = sbr.rel (0) target = $region13
    $region12: #{tpu_custom_call.1} parent=1 // pred_region
      _
    $region13: #{tpu_custom_call.1} parent=1 // pred_fallthru
      _
    %p15 = scmp.eq.s32.totalorder 0, 0
    // Predicated region
    $region14: #{tpu_custom_call.1} parent=1 // pred_check
      %p16 = pneg %p15
    $region15: #{tpu_custom_call.1} parent=1 // pred_check_branch
      %18 = sbr.rel (%p16) target = $region17
    $region16: #{tpu_custom_call.1} parent=1 // pred_region
      %vm19 = vcmask 130048
      %20 = vst.msk [vmem:[#allocation2] sm:$0xff] %vm19, 0.0
    $region17: #{tpu_custom_call.1} parent=1 // pred_fallthru
      _
    %v21 = vld [vmem:[#allocation2] sm:$0xff]
    %v22 = vld [vmem:[%s0] sm:$0xff]
    %v23 = vld [vmem:[%s1] sm:$0xff]
    %v24 = vld [vmem:[%s1 + $0x8] sm:$0xff]
    %v25 = vld [vmem:[%s1 + $0x10] sm:$0xff]
    %v26 = vld [vmem:[%s1 + $0x18] sm:$0xff]
    %vm27 = vcmask 261120
    %v29 = vsel %vm27, %v22, 0
    %31 = vmatpush.msra.mxu0 0.0
    %32 = vmatpush.msra.mxu0 0.0
    %33 = vmatpush.msra.mxu0 0.0
    %34 = vmatpush.msra.mxu0 0.0
    %35 = vmatpush.msra.mxu0 0.0
    %36 = vmatpush.msra.mxu0 0.0
    %37 = vmatpush.msra.mxu0 0.0
    %38 = vmatpush.msra.mxu0 0.0
    %39 = vmatpush.msra.mxu0 0.0
    %40 = vmatpush.msra.mxu0 0.0
    %41 = vmatpush.msra.mxu0 0.0
    %42 = vmatpush.msra.mxu0 0.0
    %43 = vmatpush.msra.mxu0 %v26
    %44 = vmatpush.msra.mxu0 %v25
    %45 = vmatpush.msra.mxu0 %v24
    %46 = vmatpush.msra.mxu0 %v23
    %47 = vmatmul.f32.gmra.mxu0 %v29
    %v48 = vpop.f32.mrf.mxu0
    %v49 = vadd.f32 0.0, %v48
    %50 = vdwg.mxu0
    %v51 = vadd.f32 %v21, %v49
    %vm52 = vcmask 130048
    %53 = vst.msk [vmem:[#allocation2] sm:$0xff] %vm52, %v51
    // Predicated region
    $region18: #{tpu_custom_call.1} parent=1 // pred_check
      %p54 = pneg %p15
    $region19: #{tpu_custom_call.1} parent=1 // pred_check_branch
      %56 = sbr.rel (%p54) target = $region21
    $region20: #{tpu_custom_call.1} parent=1 // pred_region
      %v57 = vld [vmem:[#allocation2] sm:$0xff]
      %v58 = vld [vmem:[%s2] sm:$0x1]
      %v60 = vperm.slane %v58, 0
      %v62 = vadd.f32 %v57, %v60
      %v63 = vxor.u32 %v62, 2147483648
      %v64 = vmul.f32 %v63, 1.442695
      %v65 = vpow.pop %v64
      %v66 = vadd.f32 %v65, 1.0
      %v67 = vrcp.pop %v66
      %v68 = vmul.f32 %v66, %v67
      %v69 = vsub.f32 1.0, %v68
      %v70 = vmul.f32 %v67, %v69
      %v71 = vadd.f32 %v67, %v70
      %vm72 = vweird.f32 %v66
      %vm73 = vweird.f32 %v67
      %vm74 = vmor %vm72, %vm73
      %v75 = vsel %vm74, %v67, %v71
      %v76 = vand.u32 2147483647, %v66
      %vm77 = vcmp.eq.f32.partialorder %v76, 8.507059e+37
      %v78 = vand.u32 %v66, 2147483648
      %v79 = vor.u32 1.1754944e-38, %v78
      %v80 = vsel %vm77, %v79, %v75
      %v81 = vmul.f32 1.0, %v80
      %82 = vst.msk [vmem:[#allocation3] sm:$0xff] %vm52, %v81
    $region21: #{tpu_custom_call.1} parent=1 // pred_fallthru
      _
    // Predicated region
    $region22: #{tpu_custom_call.1} parent=1 // pred_check
      _
    $region23: #{tpu_custom_call.1} parent=1 // pred_check_branch
      %84 = sbr.rel (0) target = $region25
    $region24: #{tpu_custom_call.1} parent=1 // pred_region
      %86 = vsyncadd [#allocation4], 0
      %s88 = sshll.u32 [#allocation3], 4
      %s89 = int_to_ptr.vmem [resolvable:$true] %s88
      %s90 = sshll.u32 %s3, 4
      %s91 = int_to_ptr.hbm [resolvable:$true] %s90
      %93 = dma.vmem_to_hbm [thread:$0]  %s89, 128, %s91, [#allocation4]
    $region25: #{tpu_custom_call.1} parent=1 // pred_fallthru
      _
    // Predicated region
    $region26: #{tpu_custom_call.1} parent=1 // pred_check
      _
    $region27: #{tpu_custom_call.1} parent=1 // pred_check_branch
      %95 = sbr.rel (0) target = $region29
    $region28: #{tpu_custom_call.1} parent=1 // pred_region
      %97 = dma.done [#allocation4], 128
    $region29: #{tpu_custom_call.1} parent=1 // pred_fallthru
      _
    %98 = vsyncpa [#allocation4], 1

</llo_original>
